<compile_context>
chip_gen: v7x
topology: tpu7x:2x2x1
jax: 0.10.0
libtpu: 0.0.40
codegen_flags: <defaults>
</compile_context>

<pallas_src>
import functools
import math

import jax
import jax.numpy as jnp
from jax.experimental import pallas as pl
from jax.experimental.pallas import tpu as pltpu


_LANE = 128     # lane width: hidden/output feature dims padded to multiples of this
_SUBLANE = 8    # sublane width: batch tiles are multiples of this

_SUPPORTED_ACTIVATIONS = ("relu", "tanh", "linear", "sigmoid", "leaky_relu")


def _round_up(n, m):
    return ((n + m - 1) // m) * m


def _mlp_kernel(x_ref, *refs, activations, matmul_dtype):
    """Fused multi-layer Linear(+bias)+activation on one batch tile.

    refs = (w0, b0, w1, b1, ..., wN, bN, o_ref).  Weights/biases use constant
    index_maps so they stay resident in VMEM across the whole grid; intermediate
    activations are plain values (vregs / compiler VMEM) and never touch HBM.
    """
    o_ref = refs[-1]
    params = refs[:-1]
    h = x_ref[...]
    for i, act in enumerate(activations):
        w = params[2 * i][...]       # already in matmul_dtype (pre-cast at init)
        b = params[2 * i + 1][...]   # f32
        # MXU matmul with f32 accumulation; bias + activation stay in f32
        # (VPU/EUP), which keeps v5e (no bf16 VPU/EUP path) happy too.
        y = jnp.dot(h.astype(matmul_dtype), w, preferred_element_type=jnp.float32)
        y = y + b
        if act == "relu":
            y = jnp.maximum(y, 0.0)
        elif act == "tanh":
            y = jnp.tanh(y)
        elif act == "sigmoid":
            y = jax.nn.sigmoid(y)
        elif act == "leaky_relu":
            y = jnp.where(y > 0.0, y, 0.01 * y)
        elif act == "linear":
            pass
        else:
            # TODO(synk): other torch.nn.functional activation names not wired up.
            raise NotImplementedError(f"activation '{act}' not implemented")
        h = y
    o_ref[...] = h.astype(o_ref.dtype)


def mlp_forward(x, params_pad, activations, out_dim, matmul_dtype=jnp.float32):
    """x: [B, Din] f32.  params_pad: list of (W^T [Din(_pad), Dout_pad], b [1, Dout_pad])."""
    batch, in_dim = x.shape
    assert in_dim == params_pad[0][0].shape[0], "input width mismatch"
    dl_pad = params_pad[-1][0].shape[1]
    max_width_pad = max([in_dim] + [w.shape[1] for w, _ in params_pad])

    # ---- batch tiling: sublane-aligned, no over-padding to tile multiples ----
    if batch <= _SUBLANE:
        batch_pad = batch            # block == full dim, no padding at all
        tb = batch
    else:
        batch_pad = _round_up(batch, _SUBLANE)
        # Keep ~4 live f32 activation slabs of the widest layer under ~8 MiB.
        act_budget = 8 * 1024 * 1024
        tb_cap = max(_SUBLANE,
                     (act_budget // (16 * max_width_pad)) // _SUBLANE * _SUBLANE)
        # >= 2 grid steps whenever possible so v7x's two TensorCores both get work.
        tb = max(_SUBLANE,
                 min(512, tb_cap, _round_up(pl.cdiv(batch_pad, 2), _SUBLANE)))
    if batch_pad != batch:
        # batch-dim-only zero pad (cheap); feature dim is NOT padded.
        x = jnp.pad(x, ((0, batch_pad - batch), (0, 0)))
    grid = (pl.cdiv(batch_pad, tb),)
    rows = grid[0] * tb

    kernel = functools.partial(
        _mlp_kernel, activations=tuple(activations), matmul_dtype=matmul_dtype)

    flat_params = []
    flops = 0
    transcendentals = 0
    weight_bytes = 0
    bytes_accessed = batch_pad * in_dim * 4 + batch_pad * dl_pad * 4
    for li, (w, b) in enumerate(params_pad):
        flat_params.append(w)
        flat_params.append(b)
        flops += 2 * rows * w.shape[0] * w.shape[1]
        weight_bytes += w.size * w.dtype.itemsize + b.size * b.dtype.itemsize
        bytes_accessed += w.size * w.dtype.itemsize + b.size * b.dtype.itemsize
        if activations[li] == "tanh":
            transcendentals += rows * w.shape[1]

    def build(single_buffer_weights):
        # Constant-index weight/bias blocks never change across the grid ->
        # single-buffer them so resident weights don't cost 2x VMEM.
        w_kw = {"pipeline_mode": pl.Buffered(1)} if single_buffer_weights else {}
        in_specs = [pl.BlockSpec((tb, in_dim), lambda i: (i, 0))]
        for (w, b) in params_pad:
            in_specs.append(pl.BlockSpec(w.shape, lambda i: (0, 0), **w_kw))
            in_specs.append(pl.BlockSpec(b.shape, lambda i: (0, 0), **w_kw))

        wbuf = 1 if single_buffer_weights else 2
        need = (weight_bytes * wbuf
                + 2 * tb * in_dim * 4          # double-buffered input tiles
                + 2 * tb * dl_pad * 4          # double-buffered output tiles
                + 4 * tb * max_width_pad * 4)  # live intermediate activation slabs
        # TODO(synk): if resident weights exceed per-core VMEM (e.g. > ~40 MiB on
        # v7x), tile the offending layer over an inner "arbitrary" feature axis
        # instead of keeping all weights resident.
        vmem_limit = int(min(max(need * 1.3, 32 * 1024 * 1024), 64 * 1024 * 1024))

        return pl.pallas_call(
            kernel,
            out_shape=jax.ShapeDtypeStruct((batch_pad, dl_pad), jnp.float32),
            grid=grid,
            in_specs=in_specs,
            out_specs=pl.BlockSpec((tb, dl_pad), lambda i: (i, 0)),
            compiler_params=pltpu.CompilerParams(
                dimension_semantics=("parallel",),
                vmem_limit_bytes=vmem_limit),
            cost_estimate=pl.CostEstimate(
                flops=flops,
                transcendentals=transcendentals,
                bytes_accessed=bytes_accessed),
        )

    try:
        out_pad = build(single_buffer_weights=True)(x, *flat_params)
    except Exception:
        # Fallback for jax versions where pipeline_mode=pl.Buffered(1) is not
        # accepted on top-level BlockSpecs: default (double-buffered) weights.
        out_pad = build(single_buffer_weights=False)(x, *flat_params)

    return out_pad[:batch, :out_dim]


class FullyConnectedNetworkPallas:
    """JAX/Pallas port of FullyConnectedNetwork (use_batch_norm=False, dropout=0)."""

    # TODO(synk): BatchNorm1d and Dropout branches of the PyTorch module are not
    # implemented (both are disabled by the module's default constructor args).

    def __init__(self, layers, activations, min_std=0.0, key=None,
                 matmul_dtype=None):
        assert len(layers) >= 2, f"Invalid layer schema {layers} for network"
        assert len(activations) == len(layers) - 1
        for act in activations:
            if act not in _SUPPORTED_ACTIVATIONS:
                raise NotImplementedError(f"activation '{act}' not implemented")
        self.layer_sizes = list(layers)
        self.activations = list(activations)
        if matmul_dtype is None:
            # bf16 MXU inputs only pay off on wide layers (v6e/v7x 256x256 MXU);
            # narrow nets keep f32 for 1e-5-level accuracy. Accumulation is f32 either way.
            matmul_dtype = jnp.bfloat16 if max(layers) >= 256 else jnp.float32
        self.matmul_dtype = matmul_dtype

        if key is None:
            key = jax.random.PRNGKey(0)

        # Layer 0's contraction dim stays at the real input width (the input is
        # loaded unpadded); hidden/output widths are lane-padded to 128.
        in_dims_pad = [layers[0]] + [_round_up(d, _LANE) for d in layers[1:-1]]
        out_dims_pad = [_round_up(d, _LANE) for d in layers[1:]]

        self.params = []       # unpadded f32 (reference / inspection)
        self.params_pad = []   # padded, kernel-ready (weights pre-cast to matmul_dtype)
        for i, out_dim in enumerate(layers[1:]):
            in_dim = layers[i]
            # gaussian_fill_w_gain: std = max(gain * sqrt(1/dim_in), min_std)
            gain = math.sqrt(2.0) if activations[i] == "relu" else 1.0
            std = max(gain * math.sqrt(1.0 / in_dim), min_std)
            key, sub = jax.random.split(key)
            w = jax.random.normal(sub, (out_dim, in_dim), dtype=jnp.float32) * std
            b = jnp.zeros((out_dim,), dtype=jnp.float32)  # init.constant_(bias, 0)
            w_t = jnp.transpose(w)                        # [in, out]
            self.params.append((w_t, b))

            ip, op = in_dims_pad[i], out_dims_pad[i]
            w_t_pad = (jnp.zeros((ip, op), jnp.float32)
                       .at[:in_dim, :out_dim].set(w_t)).astype(matmul_dtype)
            b_pad = jnp.zeros((1, op), jnp.float32).at[0, :out_dim].set(b)
            self.params_pad.append((w_t_pad, b_pad))

    def __call__(self, x):
        return mlp_forward(x, self.params_pad, self.activations,
                           self.layer_sizes[-1], matmul_dtype=self.matmul_dtype)


def _reference_forward(net, x):
    """Pure-jnp reference of the same forward pass (unpadded f32 params)."""
    for (w_t, b), act in zip(net.params, net.activations):
        x = x @ w_t + b
        if act == "relu":
            x = jnp.maximum(x, 0.0)
        elif act == "tanh":
            x = jnp.tanh(x)
        elif act == "sigmoid":
            x = jax.nn.sigmoid(x)
        elif act == "leaky_relu":
            x = jnp.where(x > 0.0, x, 0.01 * x)
    return x


if __name__ == "__main__":
    key = jax.random.PRNGKey(0)
    k_in, k_params = jax.random.split(key)

    # Small, module-consistent shapes: FullyConnectedNetwork([16, 32, 32, 8], ...)
    layers = [16, 32, 32, 8]
    activations = ["relu", "tanh", "linear"]
    batch = 2

    net = FullyConnectedNetworkPallas(layers, activations, min_std=0.0, key=k_params)
    x = jax.random.normal(k_in, (batch, layers[0]), dtype=jnp.float32)

    out = net(x)
    out = jax.block_until_ready(out)

    ref = _reference_forward(net, x)
    assert out.shape == (batch, layers[-1])
    # Tolerance gated on matmul dtype (f32 for this narrow test network).
    tol = 1e-5 if net.matmul_dtype == jnp.float32 else 2e-2
    assert jnp.allclose(out, ref, atol=tol, rtol=tol)

    print("KERNEL_OK")
</pallas_src>

<mosaic_0001>
module attributes {stable_mosaic.version = 11 : i64} {
  func.func @_mlp_kernel(%arg0: i32, %arg1: memref<2x16xf32, #tpu.memory_space<vmem>>, %arg2: memref<16x128xf32, #tpu.memory_space<vmem>>, %arg3: memref<1x128xf32, #tpu.memory_space<vmem>>, %arg4: memref<128x128xf32, #tpu.memory_space<vmem>>, %arg5: memref<1x128xf32, #tpu.memory_space<vmem>>, %arg6: memref<128x128xf32, #tpu.memory_space<vmem>>, %arg7: memref<1x128xf32, #tpu.memory_space<vmem>>, %arg8: memref<2x128xf32, #tpu.memory_space<vmem>>) attributes {dimension_semantics = [#tpu.dimension_semantics<parallel>], iteration_bounds = array<i64: 1>, scalar_prefetch = 0 : i64, scratch_operands = 0 : i64, tpu.core_type = #tpu.core_type<tc>, window_params = [{transform_indices = @transform_0, window_bounds = array<i64: 2, 16>}, {pipeline_mode = #tpu.pipeline_mode<synchronous>, transform_indices = @transform_1, window_bounds = array<i64: 16, 128>}, {pipeline_mode = #tpu.pipeline_mode<synchronous>, transform_indices = @transform_2, window_bounds = array<i64: 1, 128>}, {pipeline_mode = #tpu.pipeline_mode<synchronous>, transform_indices = @transform_3, window_bounds = array<i64: 128, 128>}, {pipeline_mode = #tpu.pipeline_mode<synchronous>, transform_indices = @transform_4, window_bounds = array<i64: 1, 128>}, {pipeline_mode = #tpu.pipeline_mode<synchronous>, transform_indices = @transform_5, window_bounds = array<i64: 128, 128>}, {pipeline_mode = #tpu.pipeline_mode<synchronous>, transform_indices = @transform_6, window_bounds = array<i64: 1, 128>}, {transform_indices = @transform_7, window_bounds = array<i64: 2, 128>}]} {
    %c0 = arith.constant 0 : index
    %c0_0 = arith.constant 0 : index
    %0 = vector.load %arg1[%c0, %c0_0] : memref<2x16xf32, #tpu.memory_space<vmem>>, vector<2x16xf32>
    %c0_1 = arith.constant 0 : index
    %c0_2 = arith.constant 0 : index
    %1 = vector.load %arg2[%c0_1, %c0_2] : memref<16x128xf32, #tpu.memory_space<vmem>>, vector<16x128xf32>
    %c0_3 = arith.constant 0 : index
    %c0_4 = arith.constant 0 : index
    %2 = vector.load %arg3[%c0_3, %c0_4] : memref<1x128xf32, #tpu.memory_space<vmem>>, vector<1x128xf32>
    %cst = arith.constant dense<0.000000e+00> : vector<2x128xf32>
    %3 = tpu.matmul %0, %1, %cst {dimension_numbers = #tpu.dot_dimension_numbers<[1], [0], [0], [1], [0, 0, 1, 1], [], []>} : vector<2x16xf32>, vector<16x128xf32>, vector<2x128xf32> -> vector<2x128xf32>
    %4 = vector.broadcast %2 : vector<1x128xf32> to vector<2x128xf32>
    %5 = arith.addf %3, %4 : vector<2x128xf32>
    %cst_5 = arith.constant 0.000000e+00 : f32
    %6 = vector.broadcast %cst_5 : f32 to vector<2x128xf32>
    %7 = arith.maximumf %5, %6 : vector<2x128xf32>
    %c0_6 = arith.constant 0 : index
    %c0_7 = arith.constant 0 : index
    %8 = vector.load %arg4[%c0_6, %c0_7] : memref<128x128xf32, #tpu.memory_space<vmem>>, vector<128x128xf32>
    %c0_8 = arith.constant 0 : index
    %c0_9 = arith.constant 0 : index
    %9 = vector.load %arg5[%c0_8, %c0_9] : memref<1x128xf32, #tpu.memory_space<vmem>>, vector<1x128xf32>
    %cst_10 = arith.constant dense<0.000000e+00> : vector<2x128xf32>
    %10 = tpu.matmul %7, %8, %cst_10 {dimension_numbers = #tpu.dot_dimension_numbers<[1], [0], [0], [1], [0, 0, 1, 1], [], []>} : vector<2x128xf32>, vector<128x128xf32>, vector<2x128xf32> -> vector<2x128xf32>
    %11 = vector.broadcast %9 : vector<1x128xf32> to vector<2x128xf32>
    %12 = arith.addf %10, %11 : vector<2x128xf32>
    %13 = math.tanh %12 : vector<2x128xf32>
    %c0_11 = arith.constant 0 : index
    %c0_12 = arith.constant 0 : index
    %14 = vector.load %arg6[%c0_11, %c0_12] : memref<128x128xf32, #tpu.memory_space<vmem>>, vector<128x128xf32>
    %c0_13 = arith.constant 0 : index
    %c0_14 = arith.constant 0 : index
    %15 = vector.load %arg7[%c0_13, %c0_14] : memref<1x128xf32, #tpu.memory_space<vmem>>, vector<1x128xf32>
    %cst_15 = arith.constant dense<0.000000e+00> : vector<2x128xf32>
    %16 = tpu.matmul %13, %14, %cst_15 {dimension_numbers = #tpu.dot_dimension_numbers<[1], [0], [0], [1], [0, 0, 1, 1], [], []>} : vector<2x128xf32>, vector<128x128xf32>, vector<2x128xf32> -> vector<2x128xf32>
    %17 = vector.broadcast %15 : vector<1x128xf32> to vector<2x128xf32>
    %18 = arith.addf %16, %17 : vector<2x128xf32>
    %c0_16 = arith.constant 0 : index
    %c0_17 = arith.constant 0 : index
    %19 = vector.load %arg8[%c0_16, %c0_17] : memref<2x128xf32, #tpu.memory_space<vmem>>, vector<2x128xf32>
    tpu.vector_store %arg8[%c0_16, %c0_17], %18 {strides = array<i32>} : memref<2x128xf32, #tpu.memory_space<vmem>>, vector<2x128xf32>,
    return
  }
  func.func @transform_0(%arg0: i32) -> (i32, i32) {
    %c0_i32 = arith.constant 0 : i32
    %c0_i32_0 = arith.constant 0 : i32
    return %arg0, %c0_i32 : i32, i32
  }
  func.func @transform_1(%arg0: i32) -> (i32, i32) {
    %c0_i32 = arith.constant 0 : i32
    %c0_i32_0 = arith.constant 0 : i32
    %c0_i32_1 = arith.constant 0 : i32
    return %c0_i32, %c0_i32_0 : i32, i32
  }
  func.func @transform_2(%arg0: i32) -> (i32, i32) {
    %c0_i32 = arith.constant 0 : i32
    %c0_i32_0 = arith.constant 0 : i32
    %c0_i32_1 = arith.constant 0 : i32
    return %c0_i32, %c0_i32_0 : i32, i32
  }
  func.func @transform_3(%arg0: i32) -> (i32, i32) {
    %c0_i32 = arith.constant 0 : i32
    %c0_i32_0 = arith.constant 0 : i32
    %c0_i32_1 = arith.constant 0 : i32
    return %c0_i32, %c0_i32_0 : i32, i32
  }
  func.func @transform_4(%arg0: i32) -> (i32, i32) {
    %c0_i32 = arith.constant 0 : i32
    %c0_i32_0 = arith.constant 0 : i32
    %c0_i32_1 = arith.constant 0 : i32
    return %c0_i32, %c0_i32_0 : i32, i32
  }
  func.func @transform_5(%arg0: i32) -> (i32, i32) {
    %c0_i32 = arith.constant 0 : i32
    %c0_i32_0 = arith.constant 0 : i32
    %c0_i32_1 = arith.constant 0 : i32
    return %c0_i32, %c0_i32_0 : i32, i32
  }
  func.func @transform_6(%arg0: i32) -> (i32, i32) {
    %c0_i32 = arith.constant 0 : i32
    %c0_i32_0 = arith.constant 0 : i32
    %c0_i32_1 = arith.constant 0 : i32
    return %c0_i32, %c0_i32_0 : i32, i32
  }
  func.func @transform_7(%arg0: i32) -> (i32, i32) {
    %c0_i32 = arith.constant 0 : i32
    %c0_i32_0 = arith.constant 0 : i32
    return %arg0, %c0_i32 : i32, i32
  }
}

module attributes {stable_mosaic.version = 11 : i64} {
  func.func @_mlp_kernel(%arg0: i32, %arg1: memref<2x16xf32, #tpu.memory_space<vmem>>, %arg2: memref<16x128xf32, #tpu.memory_space<vmem>>, %arg3: memref<1x128xf32, #tpu.memory_space<vmem>>, %arg4: memref<128x128xf32, #tpu.memory_space<vmem>>, %arg5: memref<1x128xf32, #tpu.memory_space<vmem>>, %arg6: memref<128x128xf32, #tpu.memory_space<vmem>>, %arg7: memref<1x128xf32, #tpu.memory_space<vmem>>, %arg8: memref<2x128xf32, #tpu.memory_space<vmem>>) attributes {dimension_semantics = [#tpu.dimension_semantics<parallel>], iteration_bounds = array<i64: 1>, scalar_prefetch = 0 : i64, scratch_operands = 0 : i64, tpu.core_type = #tpu.core_type<tc>, window_params = [{transform_indices = @transform_0, window_bounds = array<i64: 2, 16>}, {pipeline_mode = #tpu.pipeline_mode<synchronous>, transform_indices = @transform_1, window_bounds = array<i64: 16, 128>}, {pipeline_mode = #tpu.pipeline_mode<synchronous>, transform_indices = @transform_2, window_bounds = array<i64: 1, 128>}, {pipeline_mode = #tpu.pipeline_mode<synchronous>, transform_indices = @transform_3, window_bounds = array<i64: 128, 128>}, {pipeline_mode = #tpu.pipeline_mode<synchronous>, transform_indices = @transform_4, window_bounds = array<i64: 1, 128>}, {pipeline_mode = #tpu.pipeline_mode<synchronous>, transform_indices = @transform_5, window_bounds = array<i64: 128, 128>}, {pipeline_mode = #tpu.pipeline_mode<synchronous>, transform_indices = @transform_6, window_bounds = array<i64: 1, 128>}, {transform_indices = @transform_7, window_bounds = array<i64: 2, 128>}]} {
    %c0 = arith.constant 0 : index
    %c0_0 = arith.constant 0 : index
    %0 = vector.load %arg1[%c0, %c0_0] : memref<2x16xf32, #tpu.memory_space<vmem>>, vector<2x16xf32>
    %c0_1 = arith.constant 0 : index
    %c0_2 = arith.constant 0 : index
    %1 = vector.load %arg2[%c0_1, %c0_2] : memref<16x128xf32, #tpu.memory_space<vmem>>, vector<16x128xf32>
    %c0_3 = arith.constant 0 : index
    %c0_4 = arith.constant 0 : index
    %2 = vector.load %arg3[%c0_3, %c0_4] : memref<1x128xf32, #tpu.memory_space<vmem>>, vector<1x128xf32>
    %cst = arith.constant dense<0.000000e+00> : vector<2x128xf32>
    %3 = tpu.matmul %0, %1, %cst {dimension_numbers = #tpu.dot_dimension_numbers<[1], [0], [0], [1], [0, 0, 1, 1], [], []>} : vector<2x16xf32>, vector<16x128xf32>, vector<2x128xf32> -> vector<2x128xf32>
    %4 = vector.broadcast %2 : vector<1x128xf32> to vector<2x128xf32>
    %5 = arith.addf %3, %4 : vector<2x128xf32>
    %cst_5 = arith.constant 0.000000e+00 : f32
    %6 = vector.broadcast %cst_5 : f32 to vector<2x128xf32>
    %7 = arith.maximumf %5, %6 : vector<2x128xf32>
    %c0_6 = arith.constant 0 : index
    %c0_7 = arith.constant 0 : index
    %8 = vector.load %arg4[%c0_6, %c0_7] : memref<128x128xf32, #tpu.memory_space<vmem>>, vector<128x128xf32>
    %c0_8 = arith.constant 0 : index
    %c0_9 = arith.constant 0 : index
    %9 = vector.load %arg5[%c0_8, %c0_9] : memref<1x128xf32, #tpu.memory_space<vmem>>, vector<1x128xf32>
    %cst_10 = arith.constant dense<0.000000e+00> : vector<2x128xf32>
    %10 = tpu.matmul %7, %8, %cst_10 {dimension_numbers = #tpu.dot_dimension_numbers<[1], [0], [0], [1], [0, 0, 1, 1], [], []>} : vector<2x128xf32>, vector<128x128xf32>, vector<2x128xf32> -> vector<2x128xf32>
    %11 = vector.broadcast %9 : vector<1x128xf32> to vector<2x128xf32>
    %12 = arith.addf %10, %11 : vector<2x128xf32>
    %13 = math.tanh %12 : vector<2x128xf32>
    %c0_11 = arith.constant 0 : index
    %c0_12 = arith.constant 0 : index
    %14 = vector.load %arg6[%c0_11, %c0_12] : memref<128x128xf32, #tpu.memory_space<vmem>>, vector<128x128xf32>
    %c0_13 = arith.constant 0 : index
    %c0_14 = arith.constant 0 : index
    %15 = vector.load %arg7[%c0_13, %c0_14] : memref<1x128xf32, #tpu.memory_space<vmem>>, vector<1x128xf32>
    %cst_15 = arith.constant dense<0.000000e+00> : vector<2x128xf32>
    %16 = tpu.matmul %13, %14, %cst_15 {dimension_numbers = #tpu.dot_dimension_numbers<[1], [0], [0], [1], [0, 0, 1, 1], [], []>} : vector<2x128xf32>, vector<128x128xf32>, vector<2x128xf32> -> vector<2x128xf32>
    %17 = vector.broadcast %15 : vector<1x128xf32> to vector<2x128xf32>
    %18 = arith.addf %16, %17 : vector<2x128xf32>
    %c0_16 = arith.constant 0 : index
    %c0_17 = arith.constant 0 : index
    %19 = vector.load %arg8[%c0_16, %c0_17] : memref<2x128xf32, #tpu.memory_space<vmem>>, vector<2x128xf32>
    tpu.vector_store %arg8[%c0_16, %c0_17], %18 {strides = array<i32>} : memref<2x128xf32, #tpu.memory_space<vmem>>, vector<2x128xf32>,
    return
  }
  func.func @transform_0(%arg0: i32) -> (i32, i32) {
    %c0_i32 = arith.constant 0 : i32
    %c0_i32_0 = arith.constant 0 : i32
    return %arg0, %c0_i32 : i32, i32
  }
  func.func @transform_1(%arg0: i32) -> (i32, i32) {
    %c0_i32 = arith.constant 0 : i32
    %c0_i32_0 = arith.constant 0 : i32
    %c0_i32_1 = arith.constant 0 : i32
    return %c0_i32, %c0_i32_0 : i32, i32
  }
  func.func @transform_2(%arg0: i32) -> (i32, i32) {
    %c0_i32 = arith.constant 0 : i32
    %c0_i32_0 = arith.constant 0 : i32
    %c0_i32_1 = arith.constant 0 : i32
    return %c0_i32, %c0_i32_0 : i32, i32
  }
  func.func @transform_3(%arg0: i32) -> (i32, i32) {
    %c0_i32 = arith.constant 0 : i32
    %c0_i32_0 = arith.constant 0 : i32
    %c0_i32_1 = arith.constant 0 : i32
    return %c0_i32, %c0_i32_0 : i32, i32
  }
  func.func @transform_4(%arg0: i32) -> (i32, i32) {
    %c0_i32 = arith.constant 0 : i32
    %c0_i32_0 = arith.constant 0 : i32
    %c0_i32_1 = arith.constant 0 : i32
    return %c0_i32, %c0_i32_0 : i32, i32
  }
  func.func @transform_5(%arg0: i32) -> (i32, i32) {
    %c0_i32 = arith.constant 0 : i32
    %c0_i32_0 = arith.constant 0 : i32
    %c0_i32_1 = arith.constant 0 : i32
    return %c0_i32, %c0_i32_0 : i32, i32
  }
  func.func @transform_6(%arg0: i32) -> (i32, i32) {
    %c0_i32 = arith.constant 0 : i32
    %c0_i32_0 = arith.constant 0 : i32
    %c0_i32_1 = arith.constant 0 : i32
    return %c0_i32, %c0_i32_0 : i32, i32
  }
  func.func @transform_7(%arg0: i32) -> (i32, i32) {
    %c0_i32 = arith.constant 0 : i32
    %c0_i32_0 = arith.constant 0 : i32
    return %arg0, %c0_i32 : i32, i32
  }
}

</mosaic_0001>

<llo_original>
// kernel: tpu_custom_call.1
$region0: #{tpu_custom_call.1}
  #allocation0 [shape = 'u32[]', space=smem, size = 0x4, offset = 0x4, fixed_abs, tag = 'smem constant byte address 0x4 - core index']
  #allocation1 [shape = 'u32[144,128]{1,0:T(1,128)}', space=vmem, size = 0x12000, scoped, tag = 'internal scratch']
  %s0 = inlined_call_operand.hbm [shape: f32[2,16], index: 0, kind: input, shape index: {}]
  %s1 = inlined_call_operand.hbm [shape: f32[16,128], index: 1, kind: input, shape index: {}]
  %s2 = inlined_call_operand.vmem [shape: f32[1,128], index: 2, kind: input, shape index: {}]
  %s3 = inlined_call_operand.hbm [shape: f32[128,128], index: 3, kind: input, shape index: {}]
  %s4 = inlined_call_operand.vmem [shape: f32[1,128], index: 4, kind: input, shape index: {}]
  %s5 = inlined_call_operand.hbm [shape: f32[128,128], index: 5, kind: input, shape index: {}]
  %s6 = inlined_call_operand.vmem [shape: f32[1,128], index: 6, kind: input, shape index: {}]
  %s7 = inlined_call_operand.hbm [shape: f32[2,128], index: 7, kind: output, shape index: {}]
  %s8 = sld [smem:[#allocation0]]
  $region54: #{tpu_custom_call.1} parent=0
    _
  %s10 = ssub.s32 1, %s8
  %s11 = scalar_select 0, %s10, %s8
  $region1: #{tpu_custom_call.1} parent=0
    #allocation2 [shape = 'u8[1024]{0}', space=vmem, size = 0x400, scoped, tag = 'input window, operand 0, single buffered']
    #allocation3 [shape = 's32[1]{0}', space=sflag, size = 0x4, scoped, tag = 'scoped memory for tpu_custom_call.1']
    #allocation4 [shape = 's32[1]{0}', space=sflag, size = 0x4, scoped, tag = 'scoped memory for tpu_custom_call.1']
    #allocation5 [shape = 'u8[8192]{0}', space=vmem, size = 0x2000, scoped, tag = 'input window, operand 1, single buffered']
    #allocation6 [shape = 's32[1]{0}', space=sflag, size = 0x4, scoped, tag = 'scoped memory for tpu_custom_call.1']
    #allocation7 [shape = 'u8[65536]{0}', space=vmem, size = 0x10000, scoped, tag = 'input window, operand 3, single buffered']
    #allocation8 [shape = 'u8[65536]{0}', space=vmem, size = 0x10000, scoped, tag = 'input window, operand 5, single buffered']
    #allocation9 [shape = 's32[1]{0}', space=sflag, size = 0x4, scoped, tag = 'scoped memory for tpu_custom_call.1']
    #allocation10 [shape = 'u8[1024]{0}', space=vmem, size = 0x400, scoped, tag = 'output window, operand 0, single buffered']
    %12 = vsyncpa [#allocation3], 0
    %13 = vsyncpa [#allocation6], 0
    %14 = vsyncpa [#allocation9], 0
    %15 = vsyncpa [#allocation4], 0
    // Predicated region
    $region2: #{tpu_custom_call.1} parent=1 // pred_check
      _
    $region3: #{tpu_custom_call.1} parent=1 // pred_check_branch
      %17 = sbr.rel (0) target = $region5
    $region4: #{tpu_custom_call.1} parent=1 // pred_region
      %s19 = ssub.s32 32, 32
      %20 = vsyncadd [#allocation3], %s19
      %s22 = sshll.u32 [#allocation2], 4
      %s23 = int_to_ptr.vmem [resolvable:$true] %s22
      %25 = dma.hbm_to_vmem [thread:$0]  %s0, 32, %s23, [#allocation3]
    $region5: #{tpu_custom_call.1} parent=1 // pred_fallthru
      _
    // Predicated region
    $region6: #{tpu_custom_call.1} parent=1 // pred_check
      _
    $region7: #{tpu_custom_call.1} parent=1 // pred_check_branch
      %27 = sbr.rel (0) target = $region9
    $region8: #{tpu_custom_call.1} parent=1 // pred_region
      %s29 = ssub.s32 256, 256
      %30 = vsyncadd [#allocation6], %s29
      %s31 = sshll.u32 [#allocation5], 4
      %s32 = int_to_ptr.vmem [resolvable:$true] %s31
      %37 = dma.hbm_to_vmem [thread:$0]  %s1, 256, %s32, [#allocation6], 128, 128, 8
    $region9: #{tpu_custom_call.1} parent=1 // pred_fallthru
      _
    // Predicated region
    $region10: #{tpu_custom_call.1} parent=1 // pred_check
      _
    $region11: #{tpu_custom_call.1} parent=1 // pred_check_branch
      %39 = sbr.rel (0) target = $region13
    $region12: #{tpu_custom_call.1} parent=1 // pred_region
      _
    $region13: #{tpu_custom_call.1} parent=1 // pred_fallthru
      _
    // Predicated region
    $region14: #{tpu_custom_call.1} parent=1 // pred_check
      _
    $region15: #{tpu_custom_call.1} parent=1 // pred_check_branch
      %41 = sbr.rel (0) target = $region17
    $region16: #{tpu_custom_call.1} parent=1 // pred_region
      %s43 = ssub.s32 2048, 2048
      %44 = vsyncadd [#allocation6], %s43
      %s45 = sshll.u32 [#allocation7], 4
      %s46 = int_to_ptr.vmem [resolvable:$true] %s45
      %51 = dma.hbm_to_vmem [thread:$0]  %s3, 2048, %s46, [#allocation6], 128, 128, 8
    $region17: #{tpu_custom_call.1} parent=1 // pred_fallthru
      _
    // Predicated region
    $region18: #{tpu_custom_call.1} parent=1 // pred_check
      _
    $region19: #{tpu_custom_call.1} parent=1 // pred_check_branch
      %53 = sbr.rel (0) target = $region21
    $region20: #{tpu_custom_call.1} parent=1 // pred_region
      _
    $region21: #{tpu_custom_call.1} parent=1 // pred_fallthru
      _
    // Predicated region
    $region22: #{tpu_custom_call.1} parent=1 // pred_check
      _
    $region23: #{tpu_custom_call.1} parent=1 // pred_check_branch
      %55 = sbr.rel (0) target = $region25
    $region24: #{tpu_custom_call.1} parent=1 // pred_region
      %s57 = ssub.s32 2048, 2048
      %58 = vsyncadd [#allocation9], %s57
      %s59 = sshll.u32 [#allocation8], 4
      %s60 = int_to_ptr.vmem [resolvable:$true] %s59
      %65 = dma.hbm_to_vmem [thread:$0]  %s5, 2048, %s60, [#allocation9], 128, 128, 8
    $region25: #{tpu_custom_call.1} parent=1 // pred_fallthru
      _
    // Predicated region
    $region26: #{tpu_custom_call.1} parent=1 // pred_check
      _
    $region27: #{tpu_custom_call.1} parent=1 // pred_check_branch
      %67 = sbr.rel (0) target = $region29
    $region28: #{tpu_custom_call.1} parent=1 // pred_region
      _
    $region29: #{tpu_custom_call.1} parent=1 // pred_fallthru
      _
    // Predicated region
    $region30: #{tpu_custom_call.1} parent=1 // pred_check
      _
    $region31: #{tpu_custom_call.1} parent=1 // pred_check_branch
      %69 = sbr.rel (0) target = $region33
    $region32: #{tpu_custom_call.1} parent=1 // pred_region
      %70 = dma.done [#allocation3], 32
    $region33: #{tpu_custom_call.1} parent=1 // pred_fallthru
      _
    // Predicated region
    $region34: #{tpu_custom_call.1} parent=1 // pred_check
      _
    $region35: #{tpu_custom_call.1} parent=1 // pred_check_branch
      %72 = sbr.rel (0) target = $region37
    $region36: #{tpu_custom_call.1} parent=1 // pred_region
      %73 = dma.done [#allocation6], 256
    $region37: #{tpu_custom_call.1} parent=1 // pred_fallthru
      _
    // Predicated region
    $region38: #{tpu_custom_call.1} parent=1 // pred_check
      _
    $region39: #{tpu_custom_call.1} parent=1 // pred_check_branch
      %75 = sbr.rel (0) target = $region41
    $region40: #{tpu_custom_call.1} parent=1 // pred_region
      %76 = dma.done [#allocation6], 2048
    $region41: #{tpu_custom_call.1} parent=1 // pred_fallthru
      _
    // Predicated region
    $region42: #{tpu_custom_call.1} parent=1 // pred_check
      _
    $region43: #{tpu_custom_call.1} parent=1 // pred_check_branch
      %78 = sbr.rel (0) target = $region45
    $region44: #{tpu_custom_call.1} parent=1 // pred_region
      %79 = dma.done [#allocation9], 2048
    $region45: #{tpu_custom_call.1} parent=1 // pred_fallthru
      _
    %v80 = vld [vmem:[#allocation2] sm:$0x3]
    %v81 = vld [vmem:[#allocation5] sm:$0xff]
    %v82 = vld [vmem:[#allocation5 + $0x8] sm:$0xff]
    %v83 = vld [vmem:[%s2] sm:$0x1]
    %v85 = vlaneseq
    %v86 = vshrl.u32 %v85, 7
    %v87 = vsub.s32 0, %v86
    %v88 = vrot.slane %v83, %v87
    %vm90 = vcmask 130048
    %v92 = vsel %vm90, %v80, 0
    %94 = vmatprep.subr.mxu0 0.0
    %95 = vmatpush1.msra.mxu0 %v81
    %96 = vmatprep.subr.mxu0 0.0
    %97 = vmatpush1.msra.mxu0 %v82
    %98 = vmatprep.subr.mxu0 0.0
    %99 = vmatpush1.msra.mxu0 0.0
    %100 = vmatprep.subr.mxu0 0.0
    %101 = vmatpush1.msra.mxu0 0.0
    %102 = vmatprep.subr.mxu0 0.0
    %103 = vmatpush1.msra.mxu0 0.0
    %104 = vmatprep.subr.mxu0 0.0
    %105 = vmatpush1.msra.mxu0 0.0
    %106 = vmatprep.subr.mxu0 0.0
    %107 = vmatpush1.msra.mxu0 0.0
    %108 = vmatprep.subr.mxu0 0.0
    %109 = vmatpush1.msra.mxu0 0.0
    %110 = vmatprep.subr.mxu0 0.0
    %111 = vmatpush1.msra.mxu0 0.0
    %112 = vmatprep.subr.mxu0 0.0
    %113 = vmatpush1.msra.mxu0 0.0
    %114 = vmatprep.subr.mxu0 0.0
    %115 = vmatpush1.msra.mxu0 0.0
    %116 = vmatprep.subr.mxu0 0.0
    %117 = vmatpush1.msra.mxu0 0.0
    %118 = vmatprep.subr.mxu0 0.0
    %119 = vmatpush1.msra.mxu0 0.0
    %120 = vmatprep.subr.mxu0 0.0
    %121 = vmatpush1.msra.mxu0 0.0
    %122 = vmatprep.subr.mxu0 0.0
    %123 = vmatpush1.msra.mxu0 0.0
    %124 = vmatprep.subr.mxu0 0.0
    %125 = vmatpush1.msra.mxu0 0.0
    %126 = vmatprep.subr.mxu0 0.0
    %127 = vmatpush1.msra.mxu0 0.0
    %128 = vmatprep.subr.mxu0 0.0
    %129 = vmatpush1.msra.mxu0 0.0
    %130 = vmatprep.subr.mxu0 0.0
    %131 = vmatpush1.msra.mxu0 0.0
    %132 = vmatprep.subr.mxu0 0.0
    %133 = vmatpush1.msra.mxu0 0.0
    %134 = vmatprep.subr.mxu0 0.0
    %135 = vmatpush1.msra.mxu0 0.0
    %136 = vmatprep.subr.mxu0 0.0
    %137 = vmatpush1.msra.mxu0 0.0
    %138 = vmatprep.subr.mxu0 0.0
    %139 = vmatpush1.msra.mxu0 0.0
    %140 = vmatprep.subr.mxu0 0.0
    %141 = vmatpush1.msra.mxu0 0.0
    %142 = vmatprep.subr.mxu0 0.0
    %143 = vmatpush1.msra.mxu0 0.0
    %144 = vmatprep.subr.mxu0 0.0
    %145 = vmatpush1.msra.mxu0 0.0
    %146 = vmatprep.subr.mxu0 0.0
    %147 = vmatpush1.msra.mxu0 0.0
    %148 = vmatprep.subr.mxu0 0.0
    %149 = vmatpush1.msra.mxu0 0.0
    %150 = vmatprep.subr.mxu0 0.0
    %151 = vmatpush1.msra.mxu0 0.0
    %152 = vmatprep.subr.mxu0 0.0
    %153 = vmatpush1.msra.mxu0 0.0
    %154 = vmatprep.subr.mxu0 0.0
    %155 = vmatpush1.msra.mxu0 0.0
    %156 = vmatprep.subr.mxu0 0.0
    %157 = vmatpush1.msra.mxu0 0.0
    %158 = vmatprep.mubr.f32.mxu0 0.0
    %159 = vmatmul.mubr.f32.gmra.mrb[0].mxu0 %v92
    %v160 = vpop.f32.mrb[0].mxu0
    %v161 = vadd.f32 %v88, %v160
    %v162 = vpop.f32.mrb[0].mxu0
    %163 = vdwg.mxu0
    %v164 = vmax.f32 %v161, 0.0
    %v165 = vld [vmem:[#allocation7] sm:$0xff]
    %v166 = vld [vmem:[#allocation7 + $0x8] sm:$0xff]
    %v167 = vld [vmem:[#allocation7 + $0x10] sm:$0xff]
    %v168 = vld [vmem:[#allocation7 + $0x18] sm:$0xff]
    %v169 = vld [vmem:[#allocation7 + $0x20] sm:$0xff]
    %v170 = vld [vmem:[#allocation7 + $0x28] sm:$0xff]
    %v171 = vld [vmem:[#allocation7 + $0x30] sm:$0xff]
    %v172 = vld [vmem:[#allocation7 + $0x38] sm:$0xff]
    %v173 = vld [vmem:[#allocation7 + $0x40] sm:$0xff]
    %v174 = vld [vmem:[#allocation7 + $0x48] sm:$0xff]
    %v175 = vld [vmem:[#allocation7 + $0x50] sm:$0xff]
    %v176 = vld [vmem:[#allocation7 + $0x58] sm:$0xff]
    %v177 = vld [vmem:[#allocation7 + $0x60] sm:$0xff]
    %v178 = vld [vmem:[#allocation7 + $0x68] sm:$0xff]
    %v179 = vld [vmem:[#allocation7 + $0x70] sm:$0xff]
    %v180 = vld [vmem:[#allocation7 + $0x78] sm:$0xff]
    %v181 = vld [vmem:[%s4] sm:$0x1]
    %v183 = vlaneseq
    %v184 = vshrl.u32 %v183, 7
    %v185 = vsub.s32 0, %v184
    %v186 = vrot.slane %v181, %v185
    %188 = vmatprep.subr.mxu0 0.0
    %189 = vmatpush1.msra.mxu0 %v165
    %190 = vmatprep.subr.mxu0 0.0
    %191 = vmatpush1.msra.mxu0 %v166
    %192 = vmatprep.subr.mxu0 0.0
    %193 = vmatpush1.msra.mxu0 %v167
    %194 = vmatprep.subr.mxu0 0.0
    %195 = vmatpush1.msra.mxu0 %v168
    %196 = vmatprep.subr.mxu0 0.0
    %197 = vmatpush1.msra.mxu0 %v169
    %198 = vmatprep.subr.mxu0 0.0
    %199 = vmatpush1.msra.mxu0 %v170
    %200 = vmatprep.subr.mxu0 0.0
    %201 = vmatpush1.msra.mxu0 %v171
    %202 = vmatprep.subr.mxu0 0.0
    %203 = vmatpush1.msra.mxu0 %v172
    %204 = vmatprep.subr.mxu0 0.0
    %205 = vmatpush1.msra.mxu0 %v173
    %206 = vmatprep.subr.mxu0 0.0
    %207 = vmatpush1.msra.mxu0 %v174
    %208 = vmatprep.subr.mxu0 0.0
    %209 = vmatpush1.msra.mxu0 %v175
    %210 = vmatprep.subr.mxu0 0.0
    %211 = vmatpush1.msra.mxu0 %v176
    %212 = vmatprep.subr.mxu0 0.0
    %213 = vmatpush1.msra.mxu0 %v177
    %214 = vmatprep.subr.mxu0 0.0
    %215 = vmatpush1.msra.mxu0 %v178
    %216 = vmatprep.subr.mxu0 0.0
    %217 = vmatpush1.msra.mxu0 %v179
    %218 = vmatprep.subr.mxu0 0.0
    %219 = vmatpush1.msra.mxu0 %v180
    %220 = vmatprep.subr.mxu0 0.0
    %221 = vmatpush1.msra.mxu0 0.0
    %222 = vmatprep.subr.mxu0 0.0
    %223 = vmatpush1.msra.mxu0 0.0
    %224 = vmatprep.subr.mxu0 0.0
    %225 = vmatpush1.msra.mxu0 0.0
    %226 = vmatprep.subr.mxu0 0.0
    %227 = vmatpush1.msra.mxu0 0.0
    %228 = vmatprep.subr.mxu0 0.0
    %229 = vmatpush1.msra.mxu0 0.0
    %230 = vmatprep.subr.mxu0 0.0
    %231 = vmatpush1.msra.mxu0 0.0
    %232 = vmatprep.subr.mxu0 0.0
    %233 = vmatpush1.msra.mxu0 0.0
    %234 = vmatprep.subr.mxu0 0.0
    %235 = vmatpush1.msra.mxu0 0.0
    %236 = vmatprep.subr.mxu0 0.0
    %237 = vmatpush1.msra.mxu0 0.0
    %238 = vmatprep.subr.mxu0 0.0
    %239 = vmatpush1.msra.mxu0 0.0
    %240 = vmatprep.subr.mxu0 0.0
    %241 = vmatpush1.msra.mxu0 0.0
    %242 = vmatprep.subr.mxu0 0.0
    %243 = vmatpush1.msra.mxu0 0.0
    %244 = vmatprep.subr.mxu0 0.0
    %245 = vmatpush1.msra.mxu0 0.0
    %246 = vmatprep.subr.mxu0 0.0
    %247 = vmatpush1.msra.mxu0 0.0
    %248 = vmatprep.subr.mxu0 0.0
    %249 = vmatpush1.msra.mxu0 0.0
    %250 = vmatprep.subr.mxu0 0.0
    %251 = vmatpush1.msra.mxu0 0.0
    %252 = vmatprep.mubr.f32.mxu0 0.0
    %253 = vmatmul.mubr.f32.gmra.mrb[0].mxu0 %v164
    %v254 = vpop.f32.mrb[0].mxu0
    %v255 = vadd.f32 %v186, %v254
    %v256 = vpop.f32.mrb[0].mxu0
    %257 = vdwg.mxu0
    %v258 = vtanh.pop %v255
    %v259 = vld [vmem:[#allocation8] sm:$0xff]
    %v260 = vld [vmem:[#allocation8 + $0x8] sm:$0xff]
    %v261 = vld [vmem:[#allocation8 + $0x10] sm:$0xff]
    %v262 = vld [vmem:[#allocation8 + $0x18] sm:$0xff]
    %v263 = vld [vmem:[#allocation8 + $0x20] sm:$0xff]
    %v264 = vld [vmem:[#allocation8 + $0x28] sm:$0xff]
    %v265 = vld [vmem:[#allocation8 + $0x30] sm:$0xff]
    %v266 = vld [vmem:[#allocation8 + $0x38] sm:$0xff]
    %v267 = vld [vmem:[#allocation8 + $0x40] sm:$0xff]
    %v268 = vld [vmem:[#allocation8 + $0x48] sm:$0xff]
    %v269 = vld [vmem:[#allocation8 + $0x50] sm:$0xff]
    %v270 = vld [vmem:[#allocation8 + $0x58] sm:$0xff]
    %v271 = vld [vmem:[#allocation8 + $0x60] sm:$0xff]
    %v272 = vld [vmem:[#allocation8 + $0x68] sm:$0xff]
    %v273 = vld [vmem:[#allocation8 + $0x70] sm:$0xff]
    %v274 = vld [vmem:[#allocation8 + $0x78] sm:$0xff]
    %v275 = vld [vmem:[%s6] sm:$0x1]
    %v277 = vlaneseq
    %v278 = vshrl.u32 %v277, 7
    %v279 = vsub.s32 0, %v278
    %v280 = vrot.slane %v275, %v279
    %282 = vmatprep.subr.mxu0 0.0
    %283 = vmatpush1.msra.mxu0 %v259
    %284 = vmatprep.subr.mxu0 0.0
    %285 = vmatpush1.msra.mxu0 %v260
    %286 = vmatprep.subr.mxu0 0.0
    %287 = vmatpush1.msra.mxu0 %v261
    %288 = vmatprep.subr.mxu0 0.0
    %289 = vmatpush1.msra.mxu0 %v262
    %290 = vmatprep.subr.mxu0 0.0
    %291 = vmatpush1.msra.mxu0 %v263
    %292 = vmatprep.subr.mxu0 0.0
    %293 = vmatpush1.msra.mxu0 %v264
    %294 = vmatprep.subr.mxu0 0.0
    %295 = vmatpush1.msra.mxu0 %v265
    %296 = vmatprep.subr.mxu0 0.0
    %297 = vmatpush1.msra.mxu0 %v266
    %298 = vmatprep.subr.mxu0 0.0
    %299 = vmatpush1.msra.mxu0 %v267
    %300 = vmatprep.subr.mxu0 0.0
    %301 = vmatpush1.msra.mxu0 %v268
    %302 = vmatprep.subr.mxu0 0.0
    %303 = vmatpush1.msra.mxu0 %v269
    %304 = vmatprep.subr.mxu0 0.0
    %305 = vmatpush1.msra.mxu0 %v270
    %306 = vmatprep.subr.mxu0 0.0
    %307 = vmatpush1.msra.mxu0 %v271
    %308 = vmatprep.subr.mxu0 0.0
    %309 = vmatpush1.msra.mxu0 %v272
    %310 = vmatprep.subr.mxu0 0.0
    %311 = vmatpush1.msra.mxu0 %v273
    %312 = vmatprep.subr.mxu0 0.0
    %313 = vmatpush1.msra.mxu0 %v274
    %314 = vmatprep.subr.mxu0 0.0
    %315 = vmatpush1.msra.mxu0 0.0
    %316 = vmatprep.subr.mxu0 0.0
    %317 = vmatpush1.msra.mxu0 0.0
    %318 = vmatprep.subr.mxu0 0.0
    %319 = vmatpush1.msra.mxu0 0.0
    %320 = vmatprep.subr.mxu0 0.0
    %321 = vmatpush1.msra.mxu0 0.0
    %322 = vmatprep.subr.mxu0 0.0
    %323 = vmatpush1.msra.mxu0 0.0
    %324 = vmatprep.subr.mxu0 0.0
    %325 = vmatpush1.msra.mxu0 0.0
    %326 = vmatprep.subr.mxu0 0.0
    %327 = vmatpush1.msra.mxu0 0.0
    %328 = vmatprep.subr.mxu0 0.0
    %329 = vmatpush1.msra.mxu0 0.0
    %330 = vmatprep.subr.mxu0 0.0
    %331 = vmatpush1.msra.mxu0 0.0
    %332 = vmatprep.subr.mxu0 0.0
    %333 = vmatpush1.msra.mxu0 0.0
    %334 = vmatprep.subr.mxu0 0.0
    %335 = vmatpush1.msra.mxu0 0.0
    %336 = vmatprep.subr.mxu0 0.0
    %337 = vmatpush1.msra.mxu0 0.0
    %338 = vmatprep.subr.mxu0 0.0
    %339 = vmatpush1.msra.mxu0 0.0
    %340 = vmatprep.subr.mxu0 0.0
    %341 = vmatpush1.msra.mxu0 0.0
    %342 = vmatprep.subr.mxu0 0.0
    %343 = vmatpush1.msra.mxu0 0.0
    %344 = vmatprep.subr.mxu0 0.0
    %345 = vmatpush1.msra.mxu0 0.0
    %346 = vmatprep.mubr.f32.mxu0 0.0
    %347 = vmatmul.mubr.f32.gmra.mrb[0].mxu0 %v258
    %v348 = vpop.f32.mrb[0].mxu0
    %v349 = vadd.f32 %v280, %v348
    %v350 = vpop.f32.mrb[0].mxu0
    %351 = vdwg.mxu0
    %352 = vst [vmem:[#allocation10] sm:$0x3] %v349
    // Predicated region
    $region46: #{tpu_custom_call.1} parent=1 // pred_check
      _
    $region47: #{tpu_custom_call.1} parent=1 // pred_check_branch
      %354 = sbr.rel (0) target = $region49
    $region48: #{tpu_custom_call.1} parent=1 // pred_region
      %s356 = ssub.s32 32, 32
      %357 = vsyncadd [#allocation4], %s356
      %s359 = sshll.u32 [#allocation10], 4
      %s360 = int_to_ptr.vmem [resolvable:$true] %s359
      %362 = dma.vmem_to_hbm [thread:$0]  %s360, 32, %s7, [#allocation4]
    $region49: #{tpu_custom_call.1} parent=1 // pred_fallthru
      _
    // Predicated region
    $region50: #{tpu_custom_call.1} parent=1 // pred_check
      _
    $region51: #{tpu_custom_call.1} parent=1 // pred_check_branch
      %364 = sbr.rel (0) target = $region53
    $region52: #{tpu_custom_call.1} parent=1 // pred_region
      %365 = dma.done [#allocation4], 32
    $region53: #{tpu_custom_call.1} parent=1 // pred_fallthru
      _
    %366 = vsyncpa [#allocation3], 1
    %367 = vsyncpa [#allocation6], 1
    %368 = vsyncpa [#allocation9], 1
    %369 = vsyncpa [#allocation4], 1

// kernel: tpu_custom_call.1
$region0: #{tpu_custom_call.1}
  #allocation0 [shape = 'u32[]', space=smem, size = 0x4, offset = 0x4, fixed_abs, tag = 'smem constant byte address 0x4 - core index']
  #allocation1 [shape = 'u32[144,128]{1,0:T(1,128)}', space=vmem, size = 0x12000, scoped, tag = 'internal scratch']
  %s0 = inlined_call_operand.hbm [shape: f32[2,16], index: 0, kind: input, shape index: {}]
  %s1 = inlined_call_operand.hbm [shape: f32[16,128], index: 1, kind: input, shape index: {}]
  %s2 = inlined_call_operand.vmem [shape: f32[1,128], index: 2, kind: input, shape index: {}]
  %s3 = inlined_call_operand.hbm [shape: f32[128,128], index: 3, kind: input, shape index: {}]
  %s4 = inlined_call_operand.vmem [shape: f32[1,128], index: 4, kind: input, shape index: {}]
  %s5 = inlined_call_operand.hbm [shape: f32[128,128], index: 5, kind: input, shape index: {}]
  %s6 = inlined_call_operand.vmem [shape: f32[1,128], index: 6, kind: input, shape index: {}]
  %s7 = inlined_call_operand.hbm [shape: f32[2,128], index: 7, kind: output, shape index: {}]
  %s8 = sld [smem:[#allocation0]]
  $region54: #{tpu_custom_call.1} parent=0
    _
  %s10 = ssub.s32 1, %s8
  %s11 = scalar_select 0, %s10, %s8
  $region1: #{tpu_custom_call.1} parent=0
    #allocation2 [shape = 'u8[1024]{0}', space=vmem, size = 0x400, scoped, tag = 'input window, operand 0, single buffered']
    #allocation3 [shape = 's32[1]{0}', space=sflag, size = 0x4, scoped, tag = 'scoped memory for tpu_custom_call.1']
    #allocation4 [shape = 's32[1]{0}', space=sflag, size = 0x4, scoped, tag = 'scoped memory for tpu_custom_call.1']
    #allocation5 [shape = 'u8[8192]{0}', space=vmem, size = 0x2000, scoped, tag = 'input window, operand 1, single buffered']
    #allocation6 [shape = 's32[1]{0}', space=sflag, size = 0x4, scoped, tag = 'scoped memory for tpu_custom_call.1']
    #allocation7 [shape = 'u8[65536]{0}', space=vmem, size = 0x10000, scoped, tag = 'input window, operand 3, single buffered']
    #allocation8 [shape = 'u8[65536]{0}', space=vmem, size = 0x10000, scoped, tag = 'input window, operand 5, single buffered']
    #allocation9 [shape = 's32[1]{0}', space=sflag, size = 0x4, scoped, tag = 'scoped memory for tpu_custom_call.1']
    #allocation10 [shape = 'u8[1024]{0}', space=vmem, size = 0x400, scoped, tag = 'output window, operand 0, single buffered']
    %12 = vsyncpa [#allocation3], 0
    %13 = vsyncpa [#allocation6], 0
    %14 = vsyncpa [#allocation9], 0
    %15 = vsyncpa [#allocation4], 0
    // Predicated region
    $region2: #{tpu_custom_call.1} parent=1 // pred_check
      _
    $region3: #{tpu_custom_call.1} parent=1 // pred_check_branch
      %17 = sbr.rel (0) target = $region5
    $region4: #{tpu_custom_call.1} parent=1 // pred_region
      %s19 = ssub.s32 32, 32
      %20 = vsyncadd [#allocation3], %s19
      %s22 = sshll.u32 [#allocation2], 4
      %s23 = int_to_ptr.vmem [resolvable:$true] %s22
      %25 = dma.hbm_to_vmem [thread:$0]  %s0, 32, %s23, [#allocation3]
    $region5: #{tpu_custom_call.1} parent=1 // pred_fallthru
      _
    // Predicated region
    $region6: #{tpu_custom_call.1} parent=1 // pred_check
      _
    $region7: #{tpu_custom_call.1} parent=1 // pred_check_branch
      %27 = sbr.rel (0) target = $region9
    $region8: #{tpu_custom_call.1} parent=1 // pred_region
      %s29 = ssub.s32 256, 256
      %30 = vsyncadd [#allocation6], %s29
      %s31 = sshll.u32 [#allocation5], 4
      %s32 = int_to_ptr.vmem [resolvable:$true] %s31
      %37 = dma.hbm_to_vmem [thread:$0]  %s1, 256, %s32, [#allocation6], 128, 128, 8
    $region9: #{tpu_custom_call.1} parent=1 // pred_fallthru
      _
    // Predicated region
    $region10: #{tpu_custom_call.1} parent=1 // pred_check
      _
    $region11: #{tpu_custom_call.1} parent=1 // pred_check_branch
      %39 = sbr.rel (0) target = $region13
    $region12: #{tpu_custom_call.1} parent=1 // pred_region
      _
    $region13: #{tpu_custom_call.1} parent=1 // pred_fallthru
      _
    // Predicated region
    $region14: #{tpu_custom_call.1} parent=1 // pred_check
      _
    $region15: #{tpu_custom_call.1} parent=1 // pred_check_branch
      %41 = sbr.rel (0) target = $region17
    $region16: #{tpu_custom_call.1} parent=1 // pred_region
      %s43 = ssub.s32 2048, 2048
      %44 = vsyncadd [#allocation6], %s43
      %s45 = sshll.u32 [#allocation7], 4
      %s46 = int_to_ptr.vmem [resolvable:$true] %s45
      %51 = dma.hbm_to_vmem [thread:$0]  %s3, 2048, %s46, [#allocation6], 128, 128, 8
    $region17: #{tpu_custom_call.1} parent=1 // pred_fallthru
      _
    // Predicated region
    $region18: #{tpu_custom_call.1} parent=1 // pred_check
      _
    $region19: #{tpu_custom_call.1} parent=1 // pred_check_branch
      %53 = sbr.rel (0) target = $region21
    $region20: #{tpu_custom_call.1} parent=1 // pred_region
      _
    $region21: #{tpu_custom_call.1} parent=1 // pred_fallthru
      _
    // Predicated region
    $region22: #{tpu_custom_call.1} parent=1 // pred_check
      _
    $region23: #{tpu_custom_call.1} parent=1 // pred_check_branch
      %55 = sbr.rel (0) target = $region25
    $region24: #{tpu_custom_call.1} parent=1 // pred_region
      %s57 = ssub.s32 2048, 2048
      %58 = vsyncadd [#allocation9], %s57
      %s59 = sshll.u32 [#allocation8], 4
      %s60 = int_to_ptr.vmem [resolvable:$true] %s59
      %65 = dma.hbm_to_vmem [thread:$0]  %s5, 2048, %s60, [#allocation9], 128, 128, 8
    $region25: #{tpu_custom_call.1} parent=1 // pred_fallthru
      _
    // Predicated region
    $region26: #{tpu_custom_call.1} parent=1 // pred_check
      _
    $region27: #{tpu_custom_call.1} parent=1 // pred_check_branch
      %67 = sbr.rel (0) target = $region29
    $region28: #{tpu_custom_call.1} parent=1 // pred_region
      _
    $region29: #{tpu_custom_call.1} parent=1 // pred_fallthru
      _
    // Predicated region
    $region30: #{tpu_custom_call.1} parent=1 // pred_check
      _
    $region31: #{tpu_custom_call.1} parent=1 // pred_check_branch
      %69 = sbr.rel (0) target = $region33
    $region32: #{tpu_custom_call.1} parent=1 // pred_region
      %70 = dma.done [#allocation3], 32
    $region33: #{tpu_custom_call.1} parent=1 // pred_fallthru
      _
    // Predicated region
    $region34: #{tpu_custom_call.1} parent=1 // pred_check
      _
    $region35: #{tpu_custom_call.1} parent=1 // pred_check_branch
      %72 = sbr.rel (0) target = $region37
    $region36: #{tpu_custom_call.1} parent=1 // pred_region
      %73 = dma.done [#allocation6], 256
    $region37: #{tpu_custom_call.1} parent=1 // pred_fallthru
      _
    // Predicated region
    $region38: #{tpu_custom_call.1} parent=1 // pred_check
      _
    $region39: #{tpu_custom_call.1} parent=1 // pred_check_branch
      %75 = sbr.rel (0) target = $region41
    $region40: #{tpu_custom_call.1} parent=1 // pred_region
      %76 = dma.done [#allocation6], 2048
    $region41: #{tpu_custom_call.1} parent=1 // pred_fallthru
      _
    // Predicated region
    $region42: #{tpu_custom_call.1} parent=1 // pred_check
      _
    $region43: #{tpu_custom_call.1} parent=1 // pred_check_branch
      %78 = sbr.rel (0) target = $region45
    $region44: #{tpu_custom_call.1} parent=1 // pred_region
      %79 = dma.done [#allocation9], 2048
    $region45: #{tpu_custom_call.1} parent=1 // pred_fallthru
      _
    %v80 = vld [vmem:[#allocation2] sm:$0x3]
    %v81 = vld [vmem:[#allocation5] sm:$0xff]
    %v82 = vld [vmem:[#allocation5 + $0x8] sm:$0xff]
    %v83 = vld [vmem:[%s2] sm:$0x1]
    %v85 = vlaneseq
    %v86 = vshrl.u32 %v85, 7
    %v87 = vsub.s32 0, %v86
    %v88 = vrot.slane %v83, %v87
    %vm90 = vcmask 130048
    %v92 = vsel %vm90, %v80, 0
    %94 = vmatprep.subr.mxu0 0.0
    %95 = vmatpush1.msra.mxu0 %v81
    %96 = vmatprep.subr.mxu0 0.0
    %97 = vmatpush1.msra.mxu0 %v82
    %98 = vmatprep.subr.mxu0 0.0
    %99 = vmatpush1.msra.mxu0 0.0
    %100 = vmatprep.subr.mxu0 0.0
    %101 = vmatpush1.msra.mxu0 0.0
    %102 = vmatprep.subr.mxu0 0.0
    %103 = vmatpush1.msra.mxu0 0.0
    %104 = vmatprep.subr.mxu0 0.0
    %105 = vmatpush1.msra.mxu0 0.0
    %106 = vmatprep.subr.mxu0 0.0
    %107 = vmatpush1.msra.mxu0 0.0
    %108 = vmatprep.subr.mxu0 0.0
    %109 = vmatpush1.msra.mxu0 0.0
    %110 = vmatprep.subr.mxu0 0.0
    %111 = vmatpush1.msra.mxu0 0.0
    %112 = vmatprep.subr.mxu0 0.0
    %113 = vmatpush1.msra.mxu0 0.0
    %114 = vmatprep.subr.mxu0 0.0
    %115 = vmatpush1.msra.mxu0 0.0
    %116 = vmatprep.subr.mxu0 0.0
    %117 = vmatpush1.msra.mxu0 0.0
    %118 = vmatprep.subr.mxu0 0.0
    %119 = vmatpush1.msra.mxu0 0.0
    %120 = vmatprep.subr.mxu0 0.0
    %121 = vmatpush1.msra.mxu0 0.0
    %122 = vmatprep.subr.mxu0 0.0
    %123 = vmatpush1.msra.mxu0 0.0
    %124 = vmatprep.subr.mxu0 0.0
    %125 = vmatpush1.msra.mxu0 0.0
    %126 = vmatprep.subr.mxu0 0.0
    %127 = vmatpush1.msra.mxu0 0.0
    %128 = vmatprep.subr.mxu0 0.0
    %129 = vmatpush1.msra.mxu0 0.0
    %130 = vmatprep.subr.mxu0 0.0
    %131 = vmatpush1.msra.mxu0 0.0
    %132 = vmatprep.subr.mxu0 0.0
    %133 = vmatpush1.msra.mxu0 0.0
    %134 = vmatprep.subr.mxu0 0.0
    %135 = vmatpush1.msra.mxu0 0.0
    %136 = vmatprep.subr.mxu0 0.0
    %137 = vmatpush1.msra.mxu0 0.0
    %138 = vmatprep.subr.mxu0 0.0
    %139 = vmatpush1.msra.mxu0 0.0
    %140 = vmatprep.subr.mxu0 0.0
    %141 = vmatpush1.msra.mxu0 0.0
    %142 = vmatprep.subr.mxu0 0.0
    %143 = vmatpush1.msra.mxu0 0.0
    %144 = vmatprep.subr.mxu0 0.0
    %145 = vmatpush1.msra.mxu0 0.0
    %146 = vmatprep.subr.mxu0 0.0
    %147 = vmatpush1.msra.mxu0 0.0
    %148 = vmatprep.subr.mxu0 0.0
    %149 = vmatpush1.msra.mxu0 0.0
    %150 = vmatprep.subr.mxu0 0.0
    %151 = vmatpush1.msra.mxu0 0.0
    %152 = vmatprep.subr.mxu0 0.0
    %153 = vmatpush1.msra.mxu0 0.0
    %154 = vmatprep.subr.mxu0 0.0
    %155 = vmatpush1.msra.mxu0 0.0
    %156 = vmatprep.subr.mxu0 0.0
    %157 = vmatpush1.msra.mxu0 0.0
    %158 = vmatprep.mubr.f32.mxu0 0.0
    %159 = vmatmul.mubr.f32.gmra.mrb[0].mxu0 %v92
    %v160 = vpop.f32.mrb[0].mxu0
    %v161 = vadd.f32 %v88, %v160
    %v162 = vpop.f32.mrb[0].mxu0
    %163 = vdwg.mxu0
    %v164 = vmax.f32 %v161, 0.0
    %v165 = vld [vmem:[#allocation7] sm:$0xff]
    %v166 = vld [vmem:[#allocation7 + $0x8] sm:$0xff]
    %v167 = vld [vmem:[#allocation7 + $0x10] sm:$0xff]
    %v168 = vld [vmem:[#allocation7 + $0x18] sm:$0xff]
    %v169 = vld [vmem:[#allocation7 + $0x20] sm:$0xff]
    %v170 = vld [vmem:[#allocation7 + $0x28] sm:$0xff]
    %v171 = vld [vmem:[#allocation7 + $0x30] sm:$0xff]
    %v172 = vld [vmem:[#allocation7 + $0x38] sm:$0xff]
    %v173 = vld [vmem:[#allocation7 + $0x40] sm:$0xff]
    %v174 = vld [vmem:[#allocation7 + $0x48] sm:$0xff]
    %v175 = vld [vmem:[#allocation7 + $0x50] sm:$0xff]
    %v176 = vld [vmem:[#allocation7 + $0x58] sm:$0xff]
    %v177 = vld [vmem:[#allocation7 + $0x60] sm:$0xff]
    %v178 = vld [vmem:[#allocation7 + $0x68] sm:$0xff]
    %v179 = vld [vmem:[#allocation7 + $0x70] sm:$0xff]
    %v180 = vld [vmem:[#allocation7 + $0x78] sm:$0xff]
    %v181 = vld [vmem:[%s4] sm:$0x1]
    %v183 = vlaneseq
    %v184 = vshrl.u32 %v183, 7
    %v185 = vsub.s32 0, %v184
    %v186 = vrot.slane %v181, %v185
    %188 = vmatprep.subr.mxu0 0.0
    %189 = vmatpush1.msra.mxu0 %v165
    %190 = vmatprep.subr.mxu0 0.0
    %191 = vmatpush1.msra.mxu0 %v166
    %192 = vmatprep.subr.mxu0 0.0
    %193 = vmatpush1.msra.mxu0 %v167
    %194 = vmatprep.subr.mxu0 0.0
    %195 = vmatpush1.msra.mxu0 %v168
    %196 = vmatprep.subr.mxu0 0.0
    %197 = vmatpush1.msra.mxu0 %v169
    %198 = vmatprep.subr.mxu0 0.0
    %199 = vmatpush1.msra.mxu0 %v170
    %200 = vmatprep.subr.mxu0 0.0
    %201 = vmatpush1.msra.mxu0 %v171
    %202 = vmatprep.subr.mxu0 0.0
    %203 = vmatpush1.msra.mxu0 %v172
    %204 = vmatprep.subr.mxu0 0.0
    %205 = vmatpush1.msra.mxu0 %v173
    %206 = vmatprep.subr.mxu0 0.0
    %207 = vmatpush1.msra.mxu0 %v174
    %208 = vmatprep.subr.mxu0 0.0
    %209 = vmatpush1.msra.mxu0 %v175
    %210 = vmatprep.subr.mxu0 0.0
    %211 = vmatpush1.msra.mxu0 %v176
    %212 = vmatprep.subr.mxu0 0.0
    %213 = vmatpush1.msra.mxu0 %v177
    %214 = vmatprep.subr.mxu0 0.0
    %215 = vmatpush1.msra.mxu0 %v178
    %216 = vmatprep.subr.mxu0 0.0
    %217 = vmatpush1.msra.mxu0 %v179
    %218 = vmatprep.subr.mxu0 0.0
    %219 = vmatpush1.msra.mxu0 %v180
    %220 = vmatprep.subr.mxu0 0.0
    %221 = vmatpush1.msra.mxu0 0.0
    %222 = vmatprep.subr.mxu0 0.0
    %223 = vmatpush1.msra.mxu0 0.0
    %224 = vmatprep.subr.mxu0 0.0
    %225 = vmatpush1.msra.mxu0 0.0
    %226 = vmatprep.subr.mxu0 0.0
    %227 = vmatpush1.msra.mxu0 0.0
    %228 = vmatprep.subr.mxu0 0.0
    %229 = vmatpush1.msra.mxu0 0.0
    %230 = vmatprep.subr.mxu0 0.0
    %231 = vmatpush1.msra.mxu0 0.0
    %232 = vmatprep.subr.mxu0 0.0
    %233 = vmatpush1.msra.mxu0 0.0
    %234 = vmatprep.subr.mxu0 0.0
    %235 = vmatpush1.msra.mxu0 0.0
    %236 = vmatprep.subr.mxu0 0.0
    %237 = vmatpush1.msra.mxu0 0.0
    %238 = vmatprep.subr.mxu0 0.0
    %239 = vmatpush1.msra.mxu0 0.0
    %240 = vmatprep.subr.mxu0 0.0
    %241 = vmatpush1.msra.mxu0 0.0
    %242 = vmatprep.subr.mxu0 0.0
    %243 = vmatpush1.msra.mxu0 0.0
    %244 = vmatprep.subr.mxu0 0.0
    %245 = vmatpush1.msra.mxu0 0.0
    %246 = vmatprep.subr.mxu0 0.0
    %247 = vmatpush1.msra.mxu0 0.0
    %248 = vmatprep.subr.mxu0 0.0
    %249 = vmatpush1.msra.mxu0 0.0
    %250 = vmatprep.subr.mxu0 0.0
    %251 = vmatpush1.msra.mxu0 0.0
    %252 = vmatprep.mubr.f32.mxu0 0.0
    %253 = vmatmul.mubr.f32.gmra.mrb[0].mxu0 %v164
    %v254 = vpop.f32.mrb[0].mxu0
    %v255 = vadd.f32 %v186, %v254
    %v256 = vpop.f32.mrb[0].mxu0
    %257 = vdwg.mxu0
    %v258 = vtanh.pop %v255
    %v259 = vld [vmem:[#allocation8] sm:$0xff]
    %v260 = vld [vmem:[#allocation8 + $0x8] sm:$0xff]
    %v261 = vld [vmem:[#allocation8 + $0x10] sm:$0xff]
    %v262 = vld [vmem:[#allocation8 + $0x18] sm:$0xff]
    %v263 = vld [vmem:[#allocation8 + $0x20] sm:$0xff]
    %v264 = vld [vmem:[#allocation8 + $0x28] sm:$0xff]
    %v265 = vld [vmem:[#allocation8 + $0x30] sm:$0xff]
    %v266 = vld [vmem:[#allocation8 + $0x38] sm:$0xff]
    %v267 = vld [vmem:[#allocation8 + $0x40] sm:$0xff]
    %v268 = vld [vmem:[#allocation8 + $0x48] sm:$0xff]
    %v269 = vld [vmem:[#allocation8 + $0x50] sm:$0xff]
    %v270 = vld [vmem:[#allocation8 + $0x58] sm:$0xff]
    %v271 = vld [vmem:[#allocation8 + $0x60] sm:$0xff]
    %v272 = vld [vmem:[#allocation8 + $0x68] sm:$0xff]
    %v273 = vld [vmem:[#allocation8 + $0x70] sm:$0xff]
    %v274 = vld [vmem:[#allocation8 + $0x78] sm:$0xff]
    %v275 = vld [vmem:[%s6] sm:$0x1]
    %v277 = vlaneseq
    %v278 = vshrl.u32 %v277, 7
    %v279 = vsub.s32 0, %v278
    %v280 = vrot.slane %v275, %v279
    %282 = vmatprep.subr.mxu0 0.0
    %283 = vmatpush1.msra.mxu0 %v259
    %284 = vmatprep.subr.mxu0 0.0
    %285 = vmatpush1.msra.mxu0 %v260
    %286 = vmatprep.subr.mxu0 0.0
    %287 = vmatpush1.msra.mxu0 %v261
    %288 = vmatprep.subr.mxu0 0.0
    %289 = vmatpush1.msra.mxu0 %v262
    %290 = vmatprep.subr.mxu0 0.0
    %291 = vmatpush1.msra.mxu0 %v263
    %292 = vmatprep.subr.mxu0 0.0
    %293 = vmatpush1.msra.mxu0 %v264
    %294 = vmatprep.subr.mxu0 0.0
    %295 = vmatpush1.msra.mxu0 %v265
    %296 = vmatprep.subr.mxu0 0.0
    %297 = vmatpush1.msra.mxu0 %v266
    %298 = vmatprep.subr.mxu0 0.0
    %299 = vmatpush1.msra.mxu0 %v267
    %300 = vmatprep.subr.mxu0 0.0
    %301 = vmatpush1.msra.mxu0 %v268
    %302 = vmatprep.subr.mxu0 0.0
    %303 = vmatpush1.msra.mxu0 %v269
    %304 = vmatprep.subr.mxu0 0.0
    %305 = vmatpush1.msra.mxu0 %v270
    %306 = vmatprep.subr.mxu0 0.0
    %307 = vmatpush1.msra.mxu0 %v271
    %308 = vmatprep.subr.mxu0 0.0
    %309 = vmatpush1.msra.mxu0 %v272
    %310 = vmatprep.subr.mxu0 0.0
    %311 = vmatpush1.msra.mxu0 %v273
    %312 = vmatprep.subr.mxu0 0.0
    %313 = vmatpush1.msra.mxu0 %v274
    %314 = vmatprep.subr.mxu0 0.0
    %315 = vmatpush1.msra.mxu0 0.0
    %316 = vmatprep.subr.mxu0 0.0
    %317 = vmatpush1.msra.mxu0 0.0
    %318 = vmatprep.subr.mxu0 0.0
    %319 = vmatpush1.msra.mxu0 0.0
    %320 = vmatprep.subr.mxu0 0.0
    %321 = vmatpush1.msra.mxu0 0.0
    %322 = vmatprep.subr.mxu0 0.0
    %323 = vmatpush1.msra.mxu0 0.0
    %324 = vmatprep.subr.mxu0 0.0
    %325 = vmatpush1.msra.mxu0 0.0
    %326 = vmatprep.subr.mxu0 0.0
    %327 = vmatpush1.msra.mxu0 0.0
    %328 = vmatprep.subr.mxu0 0.0
    %329 = vmatpush1.msra.mxu0 0.0
    %330 = vmatprep.subr.mxu0 0.0
    %331 = vmatpush1.msra.mxu0 0.0
    %332 = vmatprep.subr.mxu0 0.0
    %333 = vmatpush1.msra.mxu0 0.0
    %334 = vmatprep.subr.mxu0 0.0
    %335 = vmatpush1.msra.mxu0 0.0
    %336 = vmatprep.subr.mxu0 0.0
    %337 = vmatpush1.msra.mxu0 0.0
    %338 = vmatprep.subr.mxu0 0.0
    %339 = vmatpush1.msra.mxu0 0.0
    %340 = vmatprep.subr.mxu0 0.0
    %341 = vmatpush1.msra.mxu0 0.0
    %342 = vmatprep.subr.mxu0 0.0
    %343 = vmatpush1.msra.mxu0 0.0
    %344 = vmatprep.subr.mxu0 0.0
    %345 = vmatpush1.msra.mxu0 0.0
    %346 = vmatprep.mubr.f32.mxu0 0.0
    %347 = vmatmul.mubr.f32.gmra.mrb[0].mxu0 %v258
    %v348 = vpop.f32.mrb[0].mxu0
    %v349 = vadd.f32 %v280, %v348
    %v350 = vpop.f32.mrb[0].mxu0
    %351 = vdwg.mxu0
    %352 = vst [vmem:[#allocation10] sm:$0x3] %v349
    // Predicated region
    $region46: #{tpu_custom_call.1} parent=1 // pred_check
      _
    $region47: #{tpu_custom_call.1} parent=1 // pred_check_branch
      %354 = sbr.rel (0) target = $region49
    $region48: #{tpu_custom_call.1} parent=1 // pred_region
      %s356 = ssub.s32 32, 32
      %357 = vsyncadd [#allocation4], %s356
      %s359 = sshll.u32 [#allocation10], 4
      %s360 = int_to_ptr.vmem [resolvable:$true] %s359
      %362 = dma.vmem_to_hbm [thread:$0]  %s360, 32, %s7, [#allocation4]
    $region49: #{tpu_custom_call.1} parent=1 // pred_fallthru
      _
    // Predicated region
    $region50: #{tpu_custom_call.1} parent=1 // pred_check
      _
    $region51: #{tpu_custom_call.1} parent=1 // pred_check_branch
      %364 = sbr.rel (0) target = $region53
    $region52: #{tpu_custom_call.1} parent=1 // pred_region
      %365 = dma.done [#allocation4], 32
    $region53: #{tpu_custom_call.1} parent=1 // pred_fallthru
      _
    %366 = vsyncpa [#allocation3], 1
    %367 = vsyncpa [#allocation6], 1
    %368 = vsyncpa [#allocation9], 1
    %369 = vsyncpa [#allocation4], 1

</llo_original>
